<compile_context>
chip_gen: v7x
topology: tpu7x:2x2x1
jax: 0.10.0
libtpu: 0.0.40
codegen_flags: <defaults>
</compile_context>

<pallas_src>
import functools

import jax
import jax.numpy as jnp
from jax import lax
from jax.experimental import pallas as pl
from jax.experimental.pallas import tpu as pltpu

_LANES = 128
_SUBLANES = 8
_ELEM_ALIGN = _LANES * _SUBLANES  # 1024-element alignment for the flat slab


def _pow_int(base, n):
    """base**n for integer n >= 1 via square-and-multiply (VPU muls only)."""
    result = None
    b = base
    while n > 0:
        if n & 1:
            result = b if result is None else result * b
        n >>= 1
        if n:
            b = b * b
    return result


def _chunk_focal_sum(x_ref, y_ref, *, chunk_rows, num_chunks, gamma, alpha,
                     binary_labels, approx_recip, masked, row0, valid_elems,
                     unroll):
    """Strip-mined focal-loss partial sum over the current block -> (8,128) f32."""
    lanes = x_ref.shape[-1]
    g = float(gamma)
    full_rows = valid_elems // lanes      # fully valid flat rows (static)
    rem_lanes = valid_elems % lanes       # valid lanes in the boundary row

    def chunk_sum(r0, acc):
        x = x_ref[pl.ds(r0, chunk_rows), :].astype(jnp.float32)
        y = y_ref[pl.ds(r0, chunk_rows), :].astype(jnp.float32)

        # Numerically stable BCE-with-logits (== BCEWithLogitsLoss(reduction='none')):
        #   bce = max(x, 0) - x*y + log1p(exp(-|x|))
        e = jnp.exp(-jnp.abs(x))
        bce = jnp.maximum(x, 0.0) - x * y + jnp.log1p(e)

        if binary_labels:
            # pt = exp(-bce) computed algebraically from e (exact for y in {0,1}).
            cond = jnp.logical_xor(y > 0.5, x >= 0.0)
            num = jnp.where(cond, e, 1.0)
            pt = num * pl.reciprocal(1.0 + e, approx=approx_recip)
        else:
            pt = jnp.exp(-bce)

        omp = 1.0 - pt
        if g == 0.0:
            mod = None
        elif g == float(int(g)) and g > 0.0:
            mod = _pow_int(omp, int(g))      # integer gamma: VPU multiplies only
        else:
            mod = jnp.power(omp, g)          # fractional gamma fallback

        focal = alpha * bce if mod is None else (alpha * mod) * bce

        if masked:
            # Flat-element validity (only the last block ever runs this path).
            rows = (row0 + r0) + lax.broadcasted_iota(jnp.int32, (chunk_rows, 1), 0)
            valid = rows < full_rows
            if rem_lanes:
                lane = lax.broadcasted_iota(jnp.int32, (1, lanes), 1)
                valid = valid | ((rows == full_rows) & (lane < rem_lanes))
            focal = jnp.where(valid, focal, 0.0)

        # Sublane x lane shaped fold: pure elementwise vreg adds on the VPU.
        partial = focal.reshape(chunk_rows // _SUBLANES, _SUBLANES, lanes).sum(axis=0)
        return acc + partial

    acc0 = jnp.zeros((_SUBLANES, lanes), jnp.float32)
    if num_chunks == 1:
        return chunk_sum(0, acc0)

    def body(c, acc):
        return chunk_sum(pl.multiple_of(c * chunk_rows, _SUBLANES), acc)

    return lax.fori_loop(0, num_chunks, body, acc0, unroll=unroll)


def _focal_loss_kernel(x_ref, y_ref, o_ref, *, tile_rows, chunk_rows,
                       steps_per_slice, steps_total, gamma, alpha,
                       binary_labels, approx_recip, mask_tail, skip_pad_steps,
                       valid_elems, unroll):
    p = pl.program_id(0)   # "parallel" axis: shards across TensorCores on v7x
    k = pl.program_id(1)   # "arbitrary" reduction axis within a slice

    # Output block (8, 128) is resident across the inner axis -> accumulator.
    @pl.when(k == 0)
    def _init():
        o_ref[...] = jnp.zeros(o_ref.shape, jnp.float32)

    num_chunks = tile_rows // chunk_rows
    last_step = steps_total - 1
    step = p * steps_per_slice + k

    accum = functools.partial(
        _chunk_focal_sum, x_ref, y_ref, chunk_rows=chunk_rows,
        num_chunks=num_chunks, gamma=gamma, alpha=alpha,
        binary_labels=binary_labels, approx_recip=approx_recip,
        valid_elems=valid_elems, unroll=unroll)

    if not (mask_tail or skip_pad_steps):
        # Every step is a full, fully valid block: no masks, no branches.
        o_ref[...] += accum(masked=False, row0=0)
    else:
        @pl.when(step < last_step)
        def _steady():
            o_ref[...] += accum(masked=False, row0=0)

        @pl.when(step == last_step)
        def _tail():
            o_ref[...] += accum(masked=mask_tail, row0=last_step * tile_rows)
        # step > last_step: slice-padding step -> skip (accumulator untouched).


def _device_defaults():
    """(per-core VMEM capacity, # TensorCores to shard over) with safe fallbacks."""
    vmem_cap = 128 << 20
    try:
        info = pltpu.get_tpu_info()
        vmem_cap = int(getattr(info, "vmem_capacity_bytes", vmem_cap))
    except Exception:
        pass
    kind = ""
    try:
        kind = jax.devices()[0].device_kind.lower()
    except Exception:
        pass
    # v7x: 2 TensorCores/chip and only 64 MiB VMEM per TC.
    num_tc = 2 if ("v7" in kind or vmem_cap <= (64 << 20)) else 1
    return vmem_cap, num_tc


def focal_loss(outputs, labels, gamma=2.0, alpha=0.8, *,
               binary_labels=False, approx_recip=False,
               target_block_bytes=4 << 20, chunk_rows=128, num_slices=None):
    """Pallas TPU focal loss (mean over all elements). Returns scalar f32."""
    assert outputs.shape == labels.shape
    total = int(outputs.size)
    assert total > 0

    vmem_cap, num_tc = _device_defaults()
    if num_slices is None:
        num_slices = num_tc

    # --- flatten to a lane-dense (R, 128) slab; pad only ragged totals -------
    x = outputs.reshape(-1)
    y = labels.reshape(-1)
    t_pad = ((total + _ELEM_ALIGN - 1) // _ELEM_ALIGN) * _ELEM_ALIGN
    if t_pad != total:
        x = jnp.pad(x, (0, t_pad - total))
        y = jnp.pad(y, (0, t_pad - total))
    rows_total = t_pad // _LANES                       # multiple of 8
    x = x.reshape(rows_total, _LANES)
    y = y.reshape(rows_total, _LANES)

    # --- dtype-aware ~target_block_bytes per-input block over the row axis ---
    itemsize = max(jnp.dtype(outputs.dtype).itemsize,
                   jnp.dtype(labels.dtype).itemsize)
    chunk_rows = max(_SUBLANES, (int(chunk_rows) // _SUBLANES) * _SUBLANES)
    if rows_total <= chunk_rows:
        chunk_rows = rows_total
        tile_rows = rows_total
    else:
        desired = max(chunk_rows,
                      (int(target_block_bytes) // (_LANES * itemsize))
                      // chunk_rows * chunk_rows)
        tile_rows = min(desired, (rows_total // chunk_rows) * chunk_rows)

    steps_total = pl.cdiv(rows_total, tile_rows)
    num_slices = max(1, min(int(num_slices), steps_total))
    steps_per_slice = pl.cdiv(steps_total, num_slices)

    mask_tail = steps_total * tile_rows * _LANES > total
    skip_pad_steps = num_slices * steps_per_slice > steps_total

    num_chunks = tile_rows // chunk_rows
    unroll = min(4, num_chunks)

    kernel = functools.partial(
        _focal_loss_kernel,
        tile_rows=tile_rows, chunk_rows=chunk_rows,
        steps_per_slice=steps_per_slice, steps_total=steps_total,
        gamma=float(gamma), alpha=float(alpha),
        binary_labels=bool(binary_labels), approx_recip=bool(approx_recip),
        mask_tail=bool(mask_tail), skip_pad_steps=bool(skip_pad_steps),
        valid_elems=total, unroll=unroll)

    def idx_map(p, k):
        # Clamp so slice-padding steps re-reference the last valid block; their
        # contribution is skipped inside the kernel.
        return (jnp.minimum(p * steps_per_slice + k, steps_total - 1), 0)

    # VMEM: 2 inputs x 2 pipeline buffers x block (+ small chunk temps / acc).
    block_bytes = tile_rows * _LANES * itemsize
    need = 4 * block_bytes + (8 << 20)
    cap = (48 << 20) if vmem_cap <= (64 << 20) else (96 << 20)
    vmem_limit = int(min(cap, max(32 << 20, need)))

    partials = pl.pallas_call(
        kernel,
        out_shape=jax.ShapeDtypeStruct((num_slices * _SUBLANES, _LANES),
                                       jnp.float32),
        grid_spec=pltpu.PrefetchScalarGridSpec(
            num_scalar_prefetch=0,
            grid=(num_slices, steps_per_slice),
            in_specs=[pl.BlockSpec((tile_rows, _LANES), idx_map),
                      pl.BlockSpec((tile_rows, _LANES), idx_map)],
            out_specs=pl.BlockSpec((_SUBLANES, _LANES), lambda p, k: (p, 0)),
        ),
        compiler_params=pltpu.CompilerParams(
            dimension_semantics=("parallel", "arbitrary"),
            vmem_limit_bytes=vmem_limit,
        ),
    )(x, y)

    # Tiny final cross-lane/sublane reduce + mean outside the kernel.
    return jnp.sum(partials) / float(total)


def _focal_loss_ref(outputs, labels, gamma=2.0, alpha=0.8):
    x = outputs.astype(jnp.float32)
    y = labels.astype(jnp.float32)
    bce = jnp.maximum(x, 0.0) - x * y + jnp.log1p(jnp.exp(-jnp.abs(x)))
    pt = jnp.exp(-bce)
    return jnp.mean(alpha * (1.0 - pt) ** gamma * bce)


if __name__ == "__main__":
    key = jax.random.PRNGKey(0)
    k1, k2, k3, k4, k5 = jax.random.split(key, 5)

    # --- test 1: binary multi-label targets, module defaults (gamma=2, alpha=0.8)
    M, N = 16, 128
    logits = jax.random.normal(k1, (M, N), dtype=jnp.float32) * 2.0
    labels = (jax.random.uniform(k2, (M, N)) > 0.5).astype(jnp.float32)
    loss = jax.block_until_ready(focal_loss(logits, labels, gamma=2.0, alpha=0.8))
    ref = _focal_loss_ref(logits, labels, gamma=2.0, alpha=0.8)
    assert jnp.allclose(loss, ref, rtol=1e-5, atol=1e-5), (loss, ref)

    # --- test 2: binary-label algebraic path (exact) + approx-reciprocal variant
    loss_b = jax.block_until_ready(focal_loss(logits, labels, binary_labels=True))
    assert jnp.allclose(loss_b, ref, rtol=1e-5, atol=1e-5), (loss_b, ref)
    loss_a = jax.block_until_ready(
        focal_loss(logits, labels, binary_labels=True, approx_recip=True))
    assert jnp.allclose(loss_a, ref, rtol=2e-2, atol=1e-3), (loss_a, ref)

    # --- test 3: ragged non-128 class count (lane-dense flatten + tail mask),
    #             soft labels, integer gamma != 2
    M2, N2 = 50, 96
    logits2 = jax.random.normal(k3, (M2, N2), dtype=jnp.float32) * 1.5
    soft2 = jax.random.uniform(k4, (M2, N2), dtype=jnp.float32)
    loss2 = jax.block_until_ready(focal_loss(logits2, soft2, gamma=3.0, alpha=0.25))
    ref2 = _focal_loss_ref(logits2, soft2, gamma=3.0, alpha=0.25)
    assert jnp.allclose(loss2, ref2, rtol=1e-5, atol=1e-5), (loss2, ref2)

    # --- test 4: fractional gamma fallback (jnp.power path)
    loss3 = jax.block_until_ready(focal_loss(logits, labels, gamma=1.5, alpha=0.8))
    ref3 = _focal_loss_ref(logits, labels, gamma=1.5, alpha=0.8)
    assert jnp.allclose(loss3, ref3, rtol=1e-5, atol=1e-5), (loss3, ref3)

    # --- test 5: multi-block grid + strip-mined inner fori_loop + tail mask +
    #             two slices (tiny forced tiles so every branch runs cheaply)
    M3, N3 = 300, 128
    logits3 = jax.random.normal(k5, (M3, N3), dtype=jnp.float32)
    labels3 = (logits3 > 0.3).astype(jnp.float32)
    loss4 = jax.block_until_ready(
        focal_loss(logits3, labels3, target_block_bytes=64 << 10,
                   chunk_rows=32, num_slices=2))
    ref4 = _focal_loss_ref(logits3, labels3)
    assert jnp.allclose(loss4, ref4, rtol=1e-5, atol=1e-5), (loss4, ref4)

    # --- test 6: bf16 logits (dtype-aware tiling + in-kernel f32 upcast)
    loss5 = jax.block_until_ready(focal_loss(logits.astype(jnp.bfloat16), labels))
    ref5 = _focal_loss_ref(logits.astype(jnp.bfloat16), labels)
    assert jnp.allclose(loss5, ref5, rtol=1e-4, atol=1e-5), (loss5, ref5)

    print("KERNEL_OK")
</pallas_src>

<mosaic_0001>
module attributes {stable_mosaic.version = 11 : i64} {
  func.func @_focal_loss_kernel(%arg0: i32, %arg1: i32, %arg2: memref<16x128xf32, #tpu.memory_space<vmem>>, %arg3: memref<16x128xf32, #tpu.memory_space<vmem>>, %arg4: memref<8x128xf32, #tpu.memory_space<vmem>>) attributes {dimension_semantics = [#tpu.dimension_semantics<parallel>, #tpu.dimension_semantics<arbitrary>], iteration_bounds = array<i64: 1, 1>, scalar_prefetch = 0 : i64, scratch_operands = 0 : i64, tpu.core_type = #tpu.core_type<tc>, window_params = [{transform_indices = @transform_0, window_bounds = array<i64: 16, 128>}, {transform_indices = @transform_1, window_bounds = array<i64: 16, 128>}, {transform_indices = @transform_2, window_bounds = array<i64: 8, 128>}]} {
    %c0_i32 = arith.constant 0 : i32
    %0 = arith.cmpi eq, %arg1, %c0_i32 : i32
    %1 = arith.extui %0 : i1 to i32
    %c0_i32_0 = arith.constant 0 : i32
    %2 = arith.cmpi ne, %1, %c0_i32_0 : i32
    scf.if %2 {
      %cst_14 = arith.constant 0.000000e+00 : f32
      %31 = vector.broadcast %cst_14 : f32 to vector<8x128xf32>
      %c0_15 = arith.constant 0 : index
      %c0_16 = arith.constant 0 : index
      %32 = vector.load %arg4[%c0_15, %c0_16] : memref<8x128xf32, #tpu.memory_space<vmem>>, vector<8x128xf32>
      tpu.vector_store %arg4[%c0_15, %c0_16], %31 {strides = array<i32>} : memref<8x128xf32, #tpu.memory_space<vmem>>, vector<8x128xf32>,
    } else {
    }
    %c0 = arith.constant 0 : index
    %c0_1 = arith.constant 0 : index
    %3 = vector.load %arg4[%c0, %c0_1] : memref<8x128xf32, #tpu.memory_space<vmem>>, vector<8x128xf32>
    %cst = arith.constant 0.000000e+00 : f32
    %4 = vector.broadcast %cst : f32 to vector<8x128xf32>
    %c0_2 = arith.constant 0 : index
    %c0_3 = arith.constant 0 : index
    %5 = vector.load %arg2[%c0_2, %c0_3] : memref<16x128xf32, #tpu.memory_space<vmem>>, vector<16x128xf32>
    %c0_4 = arith.constant 0 : index
    %c0_5 = arith.constant 0 : index
    %6 = vector.load %arg3[%c0_4, %c0_5] : memref<16x128xf32, #tpu.memory_space<vmem>>, vector<16x128xf32>
    %7 = math.absf %5 : vector<16x128xf32>
    %cst_6 = arith.constant 0.000000e+00 : f32
    %8 = vector.broadcast %cst_6 : f32 to vector<16x128xf32>
    %9 = arith.subf %8, %7 : vector<16x128xf32>
    %10 = math.exp %9 : vector<16x128xf32>
    %cst_7 = arith.constant 0.000000e+00 : f32
    %11 = vector.broadcast %cst_7 : f32 to vector<16x128xf32>
    %12 = arith.maximumf %5, %11 : vector<16x128xf32>
    %13 = arith.mulf %5, %6 : vector<16x128xf32>
    %14 = arith.subf %12, %13 : vector<16x128xf32>
    %15 = math.log1p %10 : vector<16x128xf32>
    %16 = arith.addf %14, %15 : vector<16x128xf32>
    %cst_8 = arith.constant 0.000000e+00 : f32
    %17 = vector.broadcast %cst_8 : f32 to vector<16x128xf32>
    %18 = arith.subf %17, %16 : vector<16x128xf32>
    %19 = math.exp %18 : vector<16x128xf32>
    %cst_9 = arith.constant 1.000000e+00 : f32
    %20 = vector.broadcast %cst_9 : f32 to vector<16x128xf32>
    %21 = arith.subf %20, %19 : vector<16x128xf32>
    %22 = arith.mulf %21, %21 : vector<16x128xf32>
    %cst_10 = arith.constant 8.000000e-01 : f32
    %23 = vector.broadcast %cst_10 : f32 to vector<16x128xf32>
    %24 = arith.mulf %23, %22 : vector<16x128xf32>
    %25 = arith.mulf %24, %16 : vector<16x128xf32>
    %26 = vector.shape_cast %25 : vector<16x128xf32> to vector<2x8x128xf32>
    %cst_11 = arith.constant dense<0.000000e+00> : vector<8x128xf32>
    %27 = vector.multi_reduction <add>, %26, %cst_11 [0] : vector<2x8x128xf32> to vector<8x128xf32>
    %28 = arith.addf %4, %27 : vector<8x128xf32>
    %29 = arith.addf %3, %28 : vector<8x128xf32>
    %c0_12 = arith.constant 0 : index
    %c0_13 = arith.constant 0 : index
    %30 = vector.load %arg4[%c0_12, %c0_13] : memref<8x128xf32, #tpu.memory_space<vmem>>, vector<8x128xf32>
    tpu.vector_store %arg4[%c0_12, %c0_13], %29 {strides = array<i32>} : memref<8x128xf32, #tpu.memory_space<vmem>>, vector<8x128xf32>,
    return
  }
  func.func @transform_0(%arg0: i32, %arg1: i32) -> (i32, i32) {
    %c1_i32 = arith.constant 1 : i32
    %0 = arith.muli %arg0, %c1_i32 : i32
    %1 = arith.addi %0, %arg1 : i32
    %c0_i32 = arith.constant 0 : i32
    %2 = arith.minsi %1, %c0_i32 : i32
    %c0_i32_0 = arith.constant 0 : i32
    %c0_i32_1 = arith.constant 0 : i32
    return %2, %c0_i32_0 : i32, i32
  }
  func.func @transform_1(%arg0: i32, %arg1: i32) -> (i32, i32) {
    %c1_i32 = arith.constant 1 : i32
    %0 = arith.muli %arg0, %c1_i32 : i32
    %1 = arith.addi %0, %arg1 : i32
    %c0_i32 = arith.constant 0 : i32
    %2 = arith.minsi %1, %c0_i32 : i32
    %c0_i32_0 = arith.constant 0 : i32
    %c0_i32_1 = arith.constant 0 : i32
    return %2, %c0_i32_0 : i32, i32
  }
  func.func @transform_2(%arg0: i32, %arg1: i32) -> (i32, i32) {
    %c0_i32 = arith.constant 0 : i32
    %c0_i32_0 = arith.constant 0 : i32
    return %arg0, %c0_i32 : i32, i32
  }
}

</mosaic_0001>

<llo_original>
// kernel: tpu_custom_call.1
$region0: #{tpu_custom_call.1}
  #allocation0 [shape = 'u32[]', space=smem, size = 0x4, offset = 0x4, fixed_abs, tag = 'smem constant byte address 0x4 - core index']
  #allocation1 [shape = 'u32[144,128]{1,0:T(1,128)}', space=vmem, size = 0x12000, scoped, tag = 'internal scratch']
  %s0 = inlined_call_operand.hbm [shape: f32[16,128], index: 0, kind: input, shape index: {}]
  %s1 = inlined_call_operand.hbm [shape: f32[16,128], index: 1, kind: input, shape index: {}]
  %s2 = inlined_call_operand.hbm [shape: f32[8,128], index: 2, kind: output, shape index: {}]
  %s3 = sld [smem:[#allocation0]]
  $region30: #{tpu_custom_call.1} parent=0
    _
  %s5 = ssub.s32 1, %s3
  %s6 = scalar_select 0, %s5, %s3
  $region1: #{tpu_custom_call.1} parent=0
    #allocation2 [shape = 'u8[8192]{0}', space=vmem, size = 0x2000, scoped, tag = 'input window, operand 0, single buffered']
    #allocation3 [shape = 's32[1]{0}', space=sflag, size = 0x4, scoped, tag = 'scoped memory for tpu_custom_call.1']
    #allocation4 [shape = 's32[1]{0}', space=sflag, size = 0x4, scoped, tag = 'scoped memory for tpu_custom_call.1']
    #allocation5 [shape = 'u8[8192]{0}', space=vmem, size = 0x2000, scoped, tag = 'input window, operand 1, single buffered']
    #allocation6 [shape = 's32[1]{0}', space=sflag, size = 0x4, scoped, tag = 'scoped memory for tpu_custom_call.1']
    #allocation7 [shape = 'u8[4096]{0}', space=vmem, size = 0x1000, scoped, tag = 'output window, operand 0, single buffered']
    %7 = vsyncpa [#allocation3], 0
    %8 = vsyncpa [#allocation6], 0
    %9 = vsyncpa [#allocation4], 0
    // Predicated region
    $region2: #{tpu_custom_call.1} parent=1 // pred_check
      _
    $region3: #{tpu_custom_call.1} parent=1 // pred_check_branch
      %11 = sbr.rel (0) target = $region5
    $region4: #{tpu_custom_call.1} parent=1 // pred_region
      %s12 = sadd.s32 0, 0
      %p13 = scmp.lt.s32.totalorder %s12, 0
      %s14 = scalar_select %p13, %s12, 0
      %s15 = smul.u32 2, %s14
      %s17 = ssub.s32 256, 256
      %18 = vsyncadd [#allocation3], %s17
      %s19 = smul.addr %s15, 128
      %s20 = scalar_lea.hbm %s0, %s19
      %s21 = sshll.u32 [#allocation2], 4
      %s22 = int_to_ptr.vmem [resolvable:$true] %s21
      %27 = dma.hbm_to_vmem [thread:$0]  %s20, 256, %s22, [#allocation3], 128, 128, 8
    $region5: #{tpu_custom_call.1} parent=1 // pred_fallthru
      _
    // Predicated region
    $region6: #{tpu_custom_call.1} parent=1 // pred_check
      _
    $region7: #{tpu_custom_call.1} parent=1 // pred_check_branch
      %29 = sbr.rel (0) target = $region9
    $region8: #{tpu_custom_call.1} parent=1 // pred_region
      %s30 = sadd.s32 0, 0
      %p31 = scmp.lt.s32.totalorder %s30, 0
      %s32 = scalar_select %p31, %s30, 0
      %s33 = smul.u32 2, %s32
      %s35 = ssub.s32 256, 256
      %36 = vsyncadd [#allocation6], %s35
      %s37 = smul.addr %s33, 128
      %s38 = scalar_lea.hbm %s1, %s37
      %s39 = sshll.u32 [#allocation5], 4
      %s40 = int_to_ptr.vmem [resolvable:$true] %s39
      %45 = dma.hbm_to_vmem [thread:$0]  %s38, 256, %s40, [#allocation6], 128, 128, 8
    $region9: #{tpu_custom_call.1} parent=1 // pred_fallthru
      _
    // Predicated region
    $region10: #{tpu_custom_call.1} parent=1 // pred_check
      _
    $region11: #{tpu_custom_call.1} parent=1 // pred_check_branch
      %47 = sbr.rel (0) target = $region13
    $region12: #{tpu_custom_call.1} parent=1 // pred_region
      %48 = dma.done [#allocation3], 256
    $region13: #{tpu_custom_call.1} parent=1 // pred_fallthru
      _
    // Predicated region
    $region14: #{tpu_custom_call.1} parent=1 // pred_check
      _
    $region15: #{tpu_custom_call.1} parent=1 // pred_check_branch
      %50 = sbr.rel (0) target = $region17
    $region16: #{tpu_custom_call.1} parent=1 // pred_region
      %51 = dma.done [#allocation6], 256
    $region17: #{tpu_custom_call.1} parent=1 // pred_fallthru
      _
    %s52 = sadd.s32 0, 0
    %p53 = scmp.lt.s32.totalorder %s52, 0
    %s54 = scalar_select %p53, %s52, 0
    %s55 = smul.u32 2, %s54
    %s56 = sadd.s32 0, 0
    %p57 = scmp.lt.s32.totalorder %s56, 0
    %s58 = scalar_select %p57, %s56, 0
    %s59 = smul.u32 2, %s58
    %p60 = scmp.eq.s32.totalorder 0, 0
    // Predicated region
    $region18: #{tpu_custom_call.1} parent=1 // pred_check
      %p61 = pneg %p60
    $region19: #{tpu_custom_call.1} parent=1 // pred_check_branch
      %63 = sbr.rel (%p61) target = $region21
    $region20: #{tpu_custom_call.1} parent=1 // pred_region
      %64 = vst [vmem:[#allocation7] sm:$0xff] 0.0
    $region21: #{tpu_custom_call.1} parent=1 // pred_fallthru
      _
    %v65 = vld [vmem:[#allocation7] sm:$0xff]
    %v66 = vld [vmem:[#allocation2] sm:$0xff]
    %v67 = vld [vmem:[#allocation2 + $0x8] sm:$0xff]
    %v68 = vld [vmem:[#allocation5] sm:$0xff]
    %v69 = vld [vmem:[#allocation5 + $0x8] sm:$0xff]
    %v70 = vand.u32 2147483647, %v66
    %v71 = vand.u32 2147483647, %v67
    %v72 = vsub.f32 0.0, %v70
    %v73 = vsub.f32 0.0, %v71
    %v74 = vmul.f32 %v72, 1.442695
    %v75 = vpow.pop %v74
    %v76 = vmul.f32 %v73, 1.442695
    %v77 = vpow.pop %v76
    %v78 = vmax.f32 %v66, 0.0
    %v79 = vmax.f32 %v67, 0.0
    %v80 = vmul.f32 %v66, %v68
    %v81 = vmul.f32 %v67, %v69
    %v82 = vsub.f32 %v78, %v80
    %v83 = vsub.f32 %v79, %v81
    %v84 = vadd.f32 %v75, 1.0
    %v85 = vlog2.pop %v84
    %v86 = vmul.f32 %v85, 0.6931472
    %v87 = vmul.f32 -0.5, %v75
    %v88 = vadd.f32 %v87, 1.0
    %v89 = vmul.f32 %v88, %v75
    %v90 = vand.u32 2147483647, %v75
    %vm91 = vcmp.lt.f32.partialorder %v90, 0.0004427343
    %v92 = vsel %vm91, %v89, %v86
    %v93 = vadd.f32 %v77, 1.0
    %v94 = vlog2.pop %v93
    %v95 = vmul.f32 %v94, 0.6931472
    %v96 = vmul.f32 -0.5, %v77
    %v97 = vadd.f32 %v96, 1.0
    %v98 = vmul.f32 %v97, %v77
    %v99 = vand.u32 2147483647, %v77
    %vm100 = vcmp.lt.f32.partialorder %v99, 0.0004427343
    %v101 = vsel %vm100, %v98, %v95
    %v102 = vadd.f32 %v82, %v92
    %v103 = vadd.f32 %v83, %v101
    %v104 = vsub.f32 0.0, %v102
    %v105 = vsub.f32 0.0, %v103
    %v106 = vmul.f32 %v104, 1.442695
    %v107 = vpow.pop %v106
    %v108 = vmul.f32 %v105, 1.442695
    %v109 = vpow.pop %v108
    %v110 = vsub.f32 1.0, %v107
    %v111 = vsub.f32 1.0, %v109
    %v112 = vmul.f32 %v110, %v110
    %v113 = vmul.f32 %v111, %v111
    %v114 = vmul.f32 %v112, 0.8
    %v115 = vmul.f32 %v113, 0.8
    %v116 = vmul.f32 %v114, %v102
    %v117 = vmul.f32 %v115, %v103
    %v118 = vadd.f32 %v116, %v117
    %v119 = vadd.f32 %v118, 0.0
    %v120 = vadd.f32 %v65, %v119
    %121 = vst [vmem:[#allocation7] sm:$0xff] %v120
    // Predicated region
    $region22: #{tpu_custom_call.1} parent=1 // pred_check
      _
    $region23: #{tpu_custom_call.1} parent=1 // pred_check_branch
      %123 = sbr.rel (0) target = $region25
    $region24: #{tpu_custom_call.1} parent=1 // pred_region
      %s125 = ssub.s32 128, 128
      %126 = vsyncadd [#allocation4], %s125
      %s128 = sshll.u32 [#allocation7], 4
      %s129 = int_to_ptr.vmem [resolvable:$true] %s128
      %131 = dma.vmem_to_hbm [thread:$0]  %s129, 128, %s2, [#allocation4]
    $region25: #{tpu_custom_call.1} parent=1 // pred_fallthru
      _
    // Predicated region
    $region26: #{tpu_custom_call.1} parent=1 // pred_check
      _
    $region27: #{tpu_custom_call.1} parent=1 // pred_check_branch
      %133 = sbr.rel (0) target = $region29
    $region28: #{tpu_custom_call.1} parent=1 // pred_region
      %134 = dma.done [#allocation4], 128
    $region29: #{tpu_custom_call.1} parent=1 // pred_fallthru
      _
    %135 = vsyncpa [#allocation3], 1
    %136 = vsyncpa [#allocation6], 1
    %137 = vsyncpa [#allocation4], 1

</llo_original>
